<compile_context>
chip_gen: v5e
topology: v5e:2x2
jax: 0.10.0
libtpu: 0.0.40
codegen_flags: <defaults>
</compile_context>

<pallas_src>
import functools

import jax
import jax.numpy as jnp
from jax.experimental import pallas as pl
from jax.experimental.pallas import tpu as pltpu


def mha_kernel(q_ref, k_ref, v_ref,
               wq_ref, bq_ref, wk_ref, bk_ref, wv_ref, bv_ref,
               wo_ref, bo_ref, o_ref, *, num_heads, compute_dtype):
    # Per-grid-step shapes: q/k/v_ref: (1, S, D); weights: (D, D) already transposed to (in, out);
    # biases: (1, D) float32. The 1/sqrt(head_dim) scale is pre-folded into wq/bq by the wrapper.
    S, D = q_ref.shape[1], q_ref.shape[2]
    H = num_heads
    hd = D // H
    f32 = jnp.float32
    # Keep strict f32 parity on the f32 path; use the cheap EUP approximation otherwise.
    approx_recip = jnp.dtype(compute_dtype) != jnp.dtype(f32)

    def project(x_ref, w_ref, b_ref):
        # Full-width (S, D) @ (D, D) matmul, f32 accumulation on the MXU, f32 bias add.
        y = jnp.dot(x_ref[0], w_ref[...], preferred_element_type=f32) + b_ref[...]
        return y.astype(compute_dtype)

    qp = project(q_ref, wq_ref, bq_ref)   # (S, D), attention scale already applied
    kp = project(k_ref, wk_ref, bk_ref)
    vp = project(v_ref, wv_ref, bv_ref)

    def split_heads(x):
        # (S, D) -> (H, S, hd); head h takes columns [h*hd, (h+1)*hd), matching .view() semantics.
        return jnp.stack([x[:, h * hd:(h + 1) * hd] for h in range(H)], axis=0)

    qh = split_heads(qp)
    kh = split_heads(kp)
    vh = split_heads(vp)

    # Batched-over-heads scaled-dot-product attention; softmax statistics kept in f32.
    scores = jnp.einsum('hqd,hkd->hqk', qh, kh, preferred_element_type=f32)   # (H, S, S)
    m = jnp.max(scores, axis=-1, keepdims=True)                               # (H, S, 1)
    p = jnp.exp(scores - m)                                                   # (H, S, S)
    l = jnp.sum(p, axis=-1, keepdims=True)                                    # (H, S, 1)
    inv_l = pl.reciprocal(l, approx=approx_recip)                             # (H, S, 1)

    ctx = jnp.einsum('hqk,hkd->hqd', p.astype(compute_dtype), vh,
                     preferred_element_type=f32)                              # (H, S, hd)
    ctx = ctx * inv_l                                                         # normalize post-PV

    # Merge heads back to (S, D) in the same column order as the PyTorch .view(), then run the
    # output projection as a single full-depth (S, D) @ (D, D) MXU matmul.
    out_cat = jnp.concatenate([ctx[h] for h in range(H)], axis=-1)            # (S, D)
    out = jnp.dot(out_cat.astype(compute_dtype), wo_ref[...],
                  preferred_element_type=f32) + bo_ref[...]
    o_ref[0] = out.astype(o_ref.dtype)


def multi_head_attention(Q, K, V, params, num_heads, *, compute_dtype=jnp.float32):
    """Fused MHA forward. params = (wq, bq, wk, bk, wv, bv, wo, bo) in PyTorch Linear layout."""
    B, S, D = Q.shape
    assert D % num_heads == 0
    wq, bq, wk, bk, wv, bv, wo, bo = params
    head_dim = D // num_heads
    scale = 1.0 / float(head_dim) ** 0.5

    # One-time wrapper-side preprocessing (plain XLA ops, not per-grid-step work):
    #   * transpose Linear weights to (in, out) so the kernel never transposes,
    #   * fold the 1/sqrt(head_dim) scale into the query projection (weight + bias),
    #   * optionally down-cast matmul operands (activations + weights); biases stay f32
    #     and are added after f32 accumulation.
    wq_t = (wq.T * scale).astype(compute_dtype)
    wk_t = wk.T.astype(compute_dtype)
    wv_t = wv.T.astype(compute_dtype)
    wo_t = wo.T.astype(compute_dtype)
    bq_s = (bq * scale).astype(jnp.float32)
    bk_f = bk.astype(jnp.float32)
    bv_f = bv.astype(jnp.float32)
    bo_f = bo.astype(jnp.float32)
    Qc = Q.astype(compute_dtype)
    Kc = K.astype(compute_dtype)
    Vc = V.astype(compute_dtype)

    kernel = functools.partial(mha_kernel, num_heads=num_heads, compute_dtype=compute_dtype)

    # Activations / output: one batch element per grid step, (1, S, D) blocks.
    act_spec = lambda: pl.BlockSpec((1, S, D), lambda b: (b, 0, 0))
    # Weights / biases: whole array resident in VMEM (constant across the grid, single copy —
    # avoids per-step double-buffered weight blocks).
    resident = lambda: pl.BlockSpec(memory_space=pltpu.MemorySpace.VMEM)

    grid_spec = pltpu.PrefetchScalarGridSpec(
        num_scalar_prefetch=0,
        grid=(B,),
        in_specs=[
            act_spec(), act_spec(), act_spec(),
            resident(), resident(),   # query  W^T (scale folded), b * scale
            resident(), resident(),   # key    W^T, b
            resident(), resident(),   # value  W^T, b
            resident(), resident(),   # fc_out W^T, b
        ],
        out_specs=pl.BlockSpec((1, S, D), lambda b: (b, 0, 0)),
    )

    # Rough per-step VMEM working set; only raise the scoped limit when it actually matters.
    itemsize = jnp.dtype(compute_dtype).itemsize
    est_bytes = (
        4 * 2 * S * D * itemsize             # double-buffered activation / output blocks
        + 4 * D * D * itemsize + 4 * D * 4   # resident weights + biases
        + 3 * S * D * itemsize               # qp / kp / vp
        + (num_heads * S * S + S * D) * 4    # f32 scores + merged context
    )
    vmem_limit = (int(min(1.5 * est_bytes, 64 * 1024 * 1024))
                  if est_bytes > 12 * 1024 * 1024 else None)

    return pl.pallas_call(
        kernel,
        out_shape=jax.ShapeDtypeStruct((B, S, D), jnp.float32),
        grid_spec=grid_spec,
        compiler_params=pltpu.CompilerParams(
            dimension_semantics=("parallel",),   # batch steps shard across TCs on v7x
            vmem_limit_bytes=vmem_limit,
        ),
    )(Qc, Kc, Vc, wq_t, bq_s, wk_t, bk_f, wv_t, bv_f, wo_t, bo_f)


def mha_reference(Q, K, V, params, num_heads):
    """Plain-JAX reference matching the PyTorch forward exactly."""
    B, S, D = Q.shape
    hd = D // num_heads
    wq, bq, wk, bk, wv, bv, wo, bo = params

    def lin(x, w, b):
        return x @ w.T + b[0]

    q = lin(Q, wq, bq).reshape(B, S, num_heads, hd).transpose(0, 2, 1, 3)
    k = lin(K, wk, bk).reshape(B, S, num_heads, hd).transpose(0, 2, 1, 3)
    v = lin(V, wv, bv).reshape(B, S, num_heads, hd).transpose(0, 2, 1, 3)
    scores = jnp.einsum('bhqd,bhkd->bhqk', q, k) / jnp.sqrt(jnp.float32(hd))
    attn = jax.nn.softmax(scores, axis=-1)
    out = jnp.einsum('bhqk,bhkd->bhqd', attn, v)
    out = out.transpose(0, 2, 1, 3).reshape(B, S, D)
    return lin(out, wo, bo)


def init_params(key, d_model):
    """Deterministic PyTorch-Linear-style init: U(-1/sqrt(in), 1/sqrt(in)).

    Biases are stored as (1, d_model) (TPU-friendly 2-D layout) but are semantically the
    PyTorch (d_model,) Linear bias.
    """
    bound = 1.0 / (d_model ** 0.5)
    keys = jax.random.split(key, 8)
    params = []
    for i in range(4):  # query, key, value, fc_out
        w = jax.random.uniform(keys[2 * i], (d_model, d_model),
                               minval=-bound, maxval=bound, dtype=jnp.float32)
        b = jax.random.uniform(keys[2 * i + 1], (1, d_model),
                               minval=-bound, maxval=bound, dtype=jnp.float32)
        params += [w, b]
    return tuple(params)


if __name__ == "__main__":
    d_model, num_heads = 32, 4
    batch, seq = 2, 8

    root = jax.random.PRNGKey(0)
    kq, kk, kv, kp = jax.random.split(root, 4)
    Q = jax.random.normal(kq, (batch, seq, d_model), dtype=jnp.float32)
    K = jax.random.normal(kk, (batch, seq, d_model), dtype=jnp.float32)
    V = jax.random.normal(kv, (batch, seq, d_model), dtype=jnp.float32)
    params = init_params(kp, d_model)

    ref = mha_reference(Q, K, V, params, num_heads)

    # Strict f32 path: must match the PyTorch-equivalent reference tightly.
    out = jax.block_until_ready(multi_head_attention(Q, K, V, params, num_heads))
    assert out.shape == (batch, seq, d_model)
    assert jnp.allclose(out, ref, atol=1e-4, rtol=1e-4), "f32 Pallas output mismatch vs reference"

    # bf16 fast path (bf16 matmul operands, f32 accumulation / softmax statistics).
    out_bf16 = jax.block_until_ready(
        multi_head_attention(Q, K, V, params, num_heads, compute_dtype=jnp.bfloat16))
    assert out_bf16.shape == (batch, seq, d_model)
    assert jnp.allclose(out_bf16, ref, atol=7.5e-2, rtol=7.5e-2), \
        "bf16 Pallas output mismatch vs reference"

    print("KERNEL_OK")
</pallas_src>

<mosaic_0001>
module attributes {stable_mosaic.version = 11 : i64} {
  func.func @mha_kernel(%arg0: i32, %arg1: memref<1x8x32xf32, #tpu.memory_space<vmem>>, %arg2: memref<1x8x32xf32, #tpu.memory_space<vmem>>, %arg3: memref<1x8x32xf32, #tpu.memory_space<vmem>>, %arg4: memref<32x32xf32, #tpu.memory_space<vmem>>, %arg5: memref<1x32xf32, #tpu.memory_space<vmem>>, %arg6: memref<32x32xf32, #tpu.memory_space<vmem>>, %arg7: memref<1x32xf32, #tpu.memory_space<vmem>>, %arg8: memref<32x32xf32, #tpu.memory_space<vmem>>, %arg9: memref<1x32xf32, #tpu.memory_space<vmem>>, %arg10: memref<32x32xf32, #tpu.memory_space<vmem>>, %arg11: memref<1x32xf32, #tpu.memory_space<vmem>>, %arg12: memref<1x8x32xf32, #tpu.memory_space<vmem>>) attributes {dimension_semantics = [#tpu.dimension_semantics<parallel>], iteration_bounds = array<i64: 2>, scalar_prefetch = 0 : i64, scratch_operands = 0 : i64, tpu.core_type = #tpu.core_type<tc>, window_params = [{transform_indices = @transform_0, window_bounds = array<i64: 1, 8, 32>}, {transform_indices = @transform_1, window_bounds = array<i64: 1, 8, 32>}, {transform_indices = @transform_2, window_bounds = array<i64: 1, 8, 32>}, {pipeline_mode = #tpu.pipeline_mode<synchronous>, transform_indices = @transform_3, window_bounds = array<i64: 32, 32>}, {pipeline_mode = #tpu.pipeline_mode<synchronous>, transform_indices = @transform_4, window_bounds = array<i64: 1, 32>}, {pipeline_mode = #tpu.pipeline_mode<synchronous>, transform_indices = @transform_5, window_bounds = array<i64: 32, 32>}, {pipeline_mode = #tpu.pipeline_mode<synchronous>, transform_indices = @transform_6, window_bounds = array<i64: 1, 32>}, {pipeline_mode = #tpu.pipeline_mode<synchronous>, transform_indices = @transform_7, window_bounds = array<i64: 32, 32>}, {pipeline_mode = #tpu.pipeline_mode<synchronous>, transform_indices = @transform_8, window_bounds = array<i64: 1, 32>}, {pipeline_mode = #tpu.pipeline_mode<synchronous>, transform_indices = @transform_9, window_bounds = array<i64: 32, 32>}, {pipeline_mode = #tpu.pipeline_mode<synchronous>, transform_indices = @transform_10, window_bounds = array<i64: 1, 32>}, {transform_indices = @transform_11, window_bounds = array<i64: 1, 8, 32>}]} {
    %c0 = arith.constant 0 : index
    %c0_0 = arith.constant 0 : index
    %c0_1 = arith.constant 0 : index
    %0 = vector.load %arg1[%c0, %c0_0, %c0_1] : memref<1x8x32xf32, #tpu.memory_space<vmem>>, vector<1x8x32xf32>
    %1 = vector.shape_cast %0 : vector<1x8x32xf32> to vector<8x32xf32>
    %c0_2 = arith.constant 0 : index
    %c0_3 = arith.constant 0 : index
    %2 = vector.load %arg4[%c0_2, %c0_3] : memref<32x32xf32, #tpu.memory_space<vmem>>, vector<32x32xf32>
    %cst = arith.constant dense<0.000000e+00> : vector<8x32xf32>
    %3 = tpu.matmul %1, %2, %cst {dimension_numbers = #tpu.dot_dimension_numbers<[1], [0], [0], [1], [0, 0, 1, 1], [], []>} : vector<8x32xf32>, vector<32x32xf32>, vector<8x32xf32> -> vector<8x32xf32>
    %c0_4 = arith.constant 0 : index
    %c0_5 = arith.constant 0 : index
    %4 = vector.load %arg5[%c0_4, %c0_5] : memref<1x32xf32, #tpu.memory_space<vmem>>, vector<1x32xf32>
    %5 = vector.broadcast %4 : vector<1x32xf32> to vector<8x32xf32>
    %6 = arith.addf %3, %5 : vector<8x32xf32>
    %c0_6 = arith.constant 0 : index
    %c0_7 = arith.constant 0 : index
    %c0_8 = arith.constant 0 : index
    %7 = vector.load %arg2[%c0_6, %c0_7, %c0_8] : memref<1x8x32xf32, #tpu.memory_space<vmem>>, vector<1x8x32xf32>
    %8 = vector.shape_cast %7 : vector<1x8x32xf32> to vector<8x32xf32>
    %c0_9 = arith.constant 0 : index
    %c0_10 = arith.constant 0 : index
    %9 = vector.load %arg6[%c0_9, %c0_10] : memref<32x32xf32, #tpu.memory_space<vmem>>, vector<32x32xf32>
    %cst_11 = arith.constant dense<0.000000e+00> : vector<8x32xf32>
    %10 = tpu.matmul %8, %9, %cst_11 {dimension_numbers = #tpu.dot_dimension_numbers<[1], [0], [0], [1], [0, 0, 1, 1], [], []>} : vector<8x32xf32>, vector<32x32xf32>, vector<8x32xf32> -> vector<8x32xf32>
    %c0_12 = arith.constant 0 : index
    %c0_13 = arith.constant 0 : index
    %11 = vector.load %arg7[%c0_12, %c0_13] : memref<1x32xf32, #tpu.memory_space<vmem>>, vector<1x32xf32>
    %12 = vector.broadcast %11 : vector<1x32xf32> to vector<8x32xf32>
    %13 = arith.addf %10, %12 : vector<8x32xf32>
    %c0_14 = arith.constant 0 : index
    %c0_15 = arith.constant 0 : index
    %c0_16 = arith.constant 0 : index
    %14 = vector.load %arg3[%c0_14, %c0_15, %c0_16] : memref<1x8x32xf32, #tpu.memory_space<vmem>>, vector<1x8x32xf32>
    %15 = vector.shape_cast %14 : vector<1x8x32xf32> to vector<8x32xf32>
    %c0_17 = arith.constant 0 : index
    %c0_18 = arith.constant 0 : index
    %16 = vector.load %arg8[%c0_17, %c0_18] : memref<32x32xf32, #tpu.memory_space<vmem>>, vector<32x32xf32>
    %cst_19 = arith.constant dense<0.000000e+00> : vector<8x32xf32>
    %17 = tpu.matmul %15, %16, %cst_19 {dimension_numbers = #tpu.dot_dimension_numbers<[1], [0], [0], [1], [0, 0, 1, 1], [], []>} : vector<8x32xf32>, vector<32x32xf32>, vector<8x32xf32> -> vector<8x32xf32>
    %c0_20 = arith.constant 0 : index
    %c0_21 = arith.constant 0 : index
    %18 = vector.load %arg9[%c0_20, %c0_21] : memref<1x32xf32, #tpu.memory_space<vmem>>, vector<1x32xf32>
    %19 = vector.broadcast %18 : vector<1x32xf32> to vector<8x32xf32>
    %20 = arith.addf %17, %19 : vector<8x32xf32>
    %21 = vector.extract_strided_slice %6 {offsets = [0, 0], sizes = [8, 8], strides = [1, 1]} : vector<8x32xf32> to vector<8x8xf32>
    %22 = vector.extract_strided_slice %6 {offsets = [0, 8], sizes = [8, 8], strides = [1, 1]} : vector<8x32xf32> to vector<8x8xf32>
    %23 = vector.extract_strided_slice %6 {offsets = [0, 16], sizes = [8, 8], strides = [1, 1]} : vector<8x32xf32> to vector<8x8xf32>
    %24 = vector.extract_strided_slice %6 {offsets = [0, 24], sizes = [8, 8], strides = [1, 1]} : vector<8x32xf32> to vector<8x8xf32>
    %25 = vector.shape_cast %21 : vector<8x8xf32> to vector<1x8x8xf32>
    %26 = vector.shape_cast %22 : vector<8x8xf32> to vector<1x8x8xf32>
    %27 = vector.shape_cast %23 : vector<8x8xf32> to vector<1x8x8xf32>
    %28 = vector.shape_cast %24 : vector<8x8xf32> to vector<1x8x8xf32>
    %29 = tpu.concatenate %25, %26, %27, %28 in 0 : vector<1x8x8xf32>, vector<1x8x8xf32>, vector<1x8x8xf32>, vector<1x8x8xf32> -> vector<4x8x8xf32>
    %30 = vector.extract_strided_slice %13 {offsets = [0, 0], sizes = [8, 8], strides = [1, 1]} : vector<8x32xf32> to vector<8x8xf32>
    %31 = vector.extract_strided_slice %13 {offsets = [0, 8], sizes = [8, 8], strides = [1, 1]} : vector<8x32xf32> to vector<8x8xf32>
    %32 = vector.extract_strided_slice %13 {offsets = [0, 16], sizes = [8, 8], strides = [1, 1]} : vector<8x32xf32> to vector<8x8xf32>
    %33 = vector.extract_strided_slice %13 {offsets = [0, 24], sizes = [8, 8], strides = [1, 1]} : vector<8x32xf32> to vector<8x8xf32>
    %34 = vector.shape_cast %30 : vector<8x8xf32> to vector<1x8x8xf32>
    %35 = vector.shape_cast %31 : vector<8x8xf32> to vector<1x8x8xf32>
    %36 = vector.shape_cast %32 : vector<8x8xf32> to vector<1x8x8xf32>
    %37 = vector.shape_cast %33 : vector<8x8xf32> to vector<1x8x8xf32>
    %38 = tpu.concatenate %34, %35, %36, %37 in 0 : vector<1x8x8xf32>, vector<1x8x8xf32>, vector<1x8x8xf32>, vector<1x8x8xf32> -> vector<4x8x8xf32>
    %39 = vector.extract_strided_slice %20 {offsets = [0, 0], sizes = [8, 8], strides = [1, 1]} : vector<8x32xf32> to vector<8x8xf32>
    %40 = vector.extract_strided_slice %20 {offsets = [0, 8], sizes = [8, 8], strides = [1, 1]} : vector<8x32xf32> to vector<8x8xf32>
    %41 = vector.extract_strided_slice %20 {offsets = [0, 16], sizes = [8, 8], strides = [1, 1]} : vector<8x32xf32> to vector<8x8xf32>
    %42 = vector.extract_strided_slice %20 {offsets = [0, 24], sizes = [8, 8], strides = [1, 1]} : vector<8x32xf32> to vector<8x8xf32>
    %43 = vector.shape_cast %39 : vector<8x8xf32> to vector<1x8x8xf32>
    %44 = vector.shape_cast %40 : vector<8x8xf32> to vector<1x8x8xf32>
    %45 = vector.shape_cast %41 : vector<8x8xf32> to vector<1x8x8xf32>
    %46 = vector.shape_cast %42 : vector<8x8xf32> to vector<1x8x8xf32>
    %47 = tpu.concatenate %43, %44, %45, %46 in 0 : vector<1x8x8xf32>, vector<1x8x8xf32>, vector<1x8x8xf32>, vector<1x8x8xf32> -> vector<4x8x8xf32>
    "tpu.trace_start"() <{level = 10 : i32, message = "hqd,hkd->hqk"}> : () -> ()
    %cst_22 = arith.constant dense<0.000000e+00> : vector<4x8x8xf32>
    %48 = tpu.matmul %29, %38, %cst_22 {dimension_numbers = #tpu.dot_dimension_numbers<[2], [2], [1], [1], [0, 0, 0, 1, 1, 1], [0], [0]>} : vector<4x8x8xf32>, vector<4x8x8xf32>, vector<4x8x8xf32> -> vector<4x8x8xf32>
    "tpu.trace_stop"() : () -> ()
    %cst_23 = arith.constant dense<0xFF800000> : vector<4x8xf32>
    %49 = vector.multi_reduction <maximumf>, %48, %cst_23 [2] : vector<4x8x8xf32> to vector<4x8xf32>
    %50 = vector.shape_cast %49 : vector<4x8xf32> to vector<4x8x1xf32>
    %51 = vector.broadcast %50 : vector<4x8x1xf32> to vector<4x8x8xf32>
    %52 = arith.subf %48, %51 : vector<4x8x8xf32>
    %53 = math.exp %52 : vector<4x8x8xf32>
    %cst_24 = arith.constant dense<0.000000e+00> : vector<4x8xf32>
    %54 = vector.multi_reduction <add>, %53, %cst_24 [2] : vector<4x8x8xf32> to vector<4x8xf32>
    %55 = vector.shape_cast %54 : vector<4x8xf32> to vector<4x8x1xf32>
    %56 = tpu.reciprocal %55 : vector<4x8x1xf32> -> vector<4x8x1xf32>
    "tpu.trace_start"() <{level = 10 : i32, message = "hqk,hkd->hqd"}> : () -> ()
    %cst_25 = arith.constant dense<0.000000e+00> : vector<4x8x8xf32>
    %57 = tpu.matmul %53, %47, %cst_25 {dimension_numbers = #tpu.dot_dimension_numbers<[2], [1], [1], [2], [0, 0, 0, 1, 1, 2], [0], [0]>} : vector<4x8x8xf32>, vector<4x8x8xf32>, vector<4x8x8xf32> -> vector<4x8x8xf32>
    "tpu.trace_stop"() : () -> ()
    %58 = vector.broadcast %56 : vector<4x8x1xf32> to vector<4x8x8xf32>
    %59 = arith.mulf %57, %58 : vector<4x8x8xf32>
    %60 = vector.extract_strided_slice %59 {offsets = [0, 0, 0], sizes = [1, 8, 8], strides = [1, 1, 1]} : vector<4x8x8xf32> to vector<1x8x8xf32>
    %61 = vector.shape_cast %60 : vector<1x8x8xf32> to vector<8x8xf32>
    %62 = vector.extract_strided_slice %59 {offsets = [1, 0, 0], sizes = [1, 8, 8], strides = [1, 1, 1]} : vector<4x8x8xf32> to vector<1x8x8xf32>
    %63 = vector.shape_cast %62 : vector<1x8x8xf32> to vector<8x8xf32>
    %64 = vector.extract_strided_slice %59 {offsets = [2, 0, 0], sizes = [1, 8, 8], strides = [1, 1, 1]} : vector<4x8x8xf32> to vector<1x8x8xf32>
    %65 = vector.shape_cast %64 : vector<1x8x8xf32> to vector<8x8xf32>
    %66 = vector.extract_strided_slice %59 {offsets = [3, 0, 0], sizes = [1, 8, 8], strides = [1, 1, 1]} : vector<4x8x8xf32> to vector<1x8x8xf32>
    %67 = vector.shape_cast %66 : vector<1x8x8xf32> to vector<8x8xf32>
    %68 = tpu.concatenate %61, %63, %65, %67 in 1 : vector<8x8xf32>, vector<8x8xf32>, vector<8x8xf32>, vector<8x8xf32> -> vector<8x32xf32>
    %c0_26 = arith.constant 0 : index
    %c0_27 = arith.constant 0 : index
    %69 = vector.load %arg10[%c0_26, %c0_27] : memref<32x32xf32, #tpu.memory_space<vmem>>, vector<32x32xf32>
    %cst_28 = arith.constant dense<0.000000e+00> : vector<8x32xf32>
    %70 = tpu.matmul %68, %69, %cst_28 {dimension_numbers = #tpu.dot_dimension_numbers<[1], [0], [0], [1], [0, 0, 1, 1], [], []>} : vector<8x32xf32>, vector<32x32xf32>, vector<8x32xf32> -> vector<8x32xf32>
    %c0_29 = arith.constant 0 : index
    %c0_30 = arith.constant 0 : index
    %71 = vector.load %arg11[%c0_29, %c0_30] : memref<1x32xf32, #tpu.memory_space<vmem>>, vector<1x32xf32>
    %72 = vector.broadcast %71 : vector<1x32xf32> to vector<8x32xf32>
    %73 = arith.addf %70, %72 : vector<8x32xf32>
    %c0_31 = arith.constant 0 : index
    %c0_32 = arith.constant 0 : index
    %c0_33 = arith.constant 0 : index
    %74 = vector.load %arg12[%c0_31, %c0_32, %c0_33] : memref<1x8x32xf32, #tpu.memory_space<vmem>>, vector<1x8x32xf32>
    %75 = vector.shape_cast %74 : vector<1x8x32xf32> to vector<8x32xf32>
    %76 = vector.shape_cast %73 : vector<8x32xf32> to vector<1x8x32xf32>
    tpu.vector_store %arg12[%c0_31, %c0_32, %c0_33], %76 {strides = array<i32>} : memref<1x8x32xf32, #tpu.memory_space<vmem>>, vector<1x8x32xf32>,
    return
  }
  func.func @transform_0(%arg0: i32) -> (i32, i32, i32) {
    %c0_i32 = arith.constant 0 : i32
    %c0_i32_0 = arith.constant 0 : i32
    %c0_i32_1 = arith.constant 0 : i32
    return %arg0, %c0_i32, %c0_i32_0 : i32, i32, i32
  }
  func.func @transform_1(%arg0: i32) -> (i32, i32, i32) {
    %c0_i32 = arith.constant 0 : i32
    %c0_i32_0 = arith.constant 0 : i32
    %c0_i32_1 = arith.constant 0 : i32
    return %arg0, %c0_i32, %c0_i32_0 : i32, i32, i32
  }
  func.func @transform_2(%arg0: i32) -> (i32, i32, i32) {
    %c0_i32 = arith.constant 0 : i32
    %c0_i32_0 = arith.constant 0 : i32
    %c0_i32_1 = arith.constant 0 : i32
    return %arg0, %c0_i32, %c0_i32_0 : i32, i32, i32
  }
  func.func @transform_3(%arg0: i32) -> (i32, i32) {
    %c0_i32 = arith.constant 0 : i32
    %c0_i32_0 = arith.constant 0 : i32
    %c0_i32_1 = arith.constant 0 : i32
    return %c0_i32, %c0_i32_0 : i32, i32
  }
  func.func @transform_4(%arg0: i32) -> (i32, i32) {
    %c0_i32 = arith.constant 0 : i32
    %c0_i32_0 = arith.constant 0 : i32
    %c0_i32_1 = arith.constant 0 : i32
    return %c0_i32, %c0_i32_0 : i32, i32
  }
  func.func @transform_5(%arg0: i32) -> (i32, i32) {
    %c0_i32 = arith.constant 0 : i32
    %c0_i32_0 = arith.constant 0 : i32
    %c0_i32_1 = arith.constant 0 : i32
    return %c0_i32, %c0_i32_0 : i32, i32
  }
  func.func @transform_6(%arg0: i32) -> (i32, i32) {
    %c0_i32 = arith.constant 0 : i32
    %c0_i32_0 = arith.constant 0 : i32
    %c0_i32_1 = arith.constant 0 : i32
    return %c0_i32, %c0_i32_0 : i32, i32
  }
  func.func @transform_7(%arg0: i32) -> (i32, i32) {
    %c0_i32 = arith.constant 0 : i32
    %c0_i32_0 = arith.constant 0 : i32
    %c0_i32_1 = arith.constant 0 : i32
    return %c0_i32, %c0_i32_0 : i32, i32
  }
  func.func @transform_8(%arg0: i32) -> (i32, i32) {
    %c0_i32 = arith.constant 0 : i32
    %c0_i32_0 = arith.constant 0 : i32
    %c0_i32_1 = arith.constant 0 : i32
    return %c0_i32, %c0_i32_0 : i32, i32
  }
  func.func @transform_9(%arg0: i32) -> (i32, i32) {
    %c0_i32 = arith.constant 0 : i32
    %c0_i32_0 = arith.constant 0 : i32
    %c0_i32_1 = arith.constant 0 : i32
    return %c0_i32, %c0_i32_0 : i32, i32
  }
  func.func @transform_10(%arg0: i32) -> (i32, i32) {
    %c0_i32 = arith.constant 0 : i32
    %c0_i32_0 = arith.constant 0 : i32
    %c0_i32_1 = arith.constant 0 : i32
    return %c0_i32, %c0_i32_0 : i32, i32
  }
  func.func @transform_11(%arg0: i32) -> (i32, i32, i32) {
    %c0_i32 = arith.constant 0 : i32
    %c0_i32_0 = arith.constant 0 : i32
    %c0_i32_1 = arith.constant 0 : i32
    return %arg0, %c0_i32, %c0_i32_0 : i32, i32, i32
  }
}

</mosaic_0001>

<llo_original>
// kernel: tpu_custom_call.1
$region0: #{tpu_custom_call.1}
  #allocation0 [shape = 'u32[]', space=smem, size = 0x4, offset = 0x4, fixed_abs, tag = 'smem constant byte address 0x4 - core index']
  #allocation1 [shape = 'u32[72,128]{1,0:T(1,128)}', space=vmem, size = 0x9000, scoped, tag = 'internal scratch']
  %s0 = inlined_call_operand.hbm [shape: f32[2,8,32], index: 0, kind: input, shape index: {}]
  %s1 = inlined_call_operand.hbm [shape: f32[2,8,32], index: 1, kind: input, shape index: {}]
  %s2 = inlined_call_operand.hbm [shape: f32[2,8,32], index: 2, kind: input, shape index: {}]
  %s3 = inlined_call_operand.hbm [shape: f32[32,32], index: 3, kind: input, shape index: {}]
  %s4 = inlined_call_operand.vmem [shape: f32[1,32], index: 4, kind: input, shape index: {}]
  %s5 = inlined_call_operand.hbm [shape: f32[32,32], index: 5, kind: input, shape index: {}]
  %s6 = inlined_call_operand.vmem [shape: f32[1,32], index: 6, kind: input, shape index: {}]
  %s7 = inlined_call_operand.hbm [shape: f32[32,32], index: 7, kind: input, shape index: {}]
  %s8 = inlined_call_operand.vmem [shape: f32[1,32], index: 8, kind: input, shape index: {}]
  %s9 = inlined_call_operand.hbm [shape: f32[32,32], index: 9, kind: input, shape index: {}]
  %s10 = inlined_call_operand.vmem [shape: f32[1,32], index: 10, kind: input, shape index: {}]
  %s11 = inlined_call_operand.hbm [shape: f32[2,8,32], index: 11, kind: output, shape index: {}]
  %s12 = sld [smem:[#allocation0]]
  $region105: #{tpu_custom_call.1} parent=0
    _
  %s14 = ssub.s32 1, %s12
  %s15 = scalar_select 0, %s14, %s12
  $region1: #{tpu_custom_call.1} parent=0
    #allocation2 [shape = 'u8[8192]{0}', space=vmem, size = 0x2000, scoped, tag = 'input window, operand 0']
    #allocation3 [shape = 's32[2]{0}', space=sflag, size = 0x8, scoped, tag = 'scoped memory for tpu_custom_call.1']
    #allocation4 [shape = 's32[2]{0}', space=sflag, size = 0x8, scoped, tag = 'scoped memory for tpu_custom_call.1']
    #allocation5 [shape = 'u8[8192]{0}', space=vmem, size = 0x2000, scoped, tag = 'input window, operand 1']
    #allocation6 [shape = 's32[2]{0}', space=sflag, size = 0x8, scoped, tag = 'scoped memory for tpu_custom_call.1']
    #allocation7 [shape = 'u8[8192]{0}', space=vmem, size = 0x2000, scoped, tag = 'input window, operand 2']
    #allocation8 [shape = 'u8[16384]{0}', space=vmem, size = 0x4000, scoped, tag = 'input window, operand 3, single buffered']
    #allocation9 [shape = 's32[1]{0}', space=sflag, size = 0x4, scoped, tag = 'scoped memory for tpu_custom_call.1']
    #allocation10 [shape = 'u8[16384]{0}', space=vmem, size = 0x4000, scoped, tag = 'input window, operand 5, single buffered']
    #allocation11 [shape = 'u8[16384]{0}', space=vmem, size = 0x4000, scoped, tag = 'input window, operand 7, single buffered']
    #allocation12 [shape = 's32[1]{0}', space=sflag, size = 0x4, scoped, tag = 'scoped memory for tpu_custom_call.1']
    #allocation13 [shape = 'u8[16384]{0}', space=vmem, size = 0x4000, scoped, tag = 'input window, operand 9, single buffered']
    #allocation14 [shape = 'u8[8192]{0}', space=vmem, size = 0x2000, scoped, tag = 'output window, operand 0']
    %16 = vsyncpa [#allocation3], 0
    %s17 = scalar_lea.sflag [#allocation3], 1
    %18 = vsyncpa %s17, 0
    %19 = vsyncpa [#allocation6], 0
    %s20 = scalar_lea.sflag [#allocation6], 1
    %21 = vsyncpa %s20, 0
    %22 = vsyncpa [#allocation9], 0
    %23 = vsyncpa [#allocation12], 0
    %24 = vsyncpa [#allocation4], 0
    %s25 = scalar_lea.sflag [#allocation4], 1
    %26 = vsyncpa %s25, 0
    loop: start=0, step=1, limit=4
    $region2: #{tpu_custom_call.1} parent=1 // loop_pre_header
      _
    $region3: #{tpu_custom_call.1} parent=1 // loop_header
      %s28 = sphi 0, %s32
      %p29 = scmp.ge.s32.totalorder %s28, 4
      %s38 = sphi 0, %s40
      %s41 = sphi 0, %s38
      %s42 = sphi 0, %s41
      %s58 = sphi 0, %s42
      %s64 = sphi 0, %s66
      %s67 = sphi 0, %s64
      %s68 = sphi 0, %s67
      %s84 = sphi 0, %s68
      %s90 = sphi 0, %s92
      %s93 = sphi 0, %s90
      %s94 = sphi 0, %s93
      %s110 = sphi 0, %s94
      %s114 = sphi 0, %s114
      %s116 = sphi 0, %s114
      %s117 = sphi 0, %s116
      %s131 = sphi 0, %s117
      %s135 = sphi 0, %s135
      %s137 = sphi 0, %s135
      %s138 = sphi 0, %s137
      %s152 = sphi 0, %s138
      %s156 = sphi 0, %s156
      %s158 = sphi 0, %s156
      %s159 = sphi 0, %s158
      %s173 = sphi 0, %s159
      %s177 = sphi 0, %s177
      %s179 = sphi 0, %s177
      %s180 = sphi 0, %s179
      %s194 = sphi 0, %s180
      %s198 = sphi 0, %s198
      %s200 = sphi 0, %s198
      %s201 = sphi 0, %s200
      %s215 = sphi 0, %s201
      %s219 = sphi 0, %s219
      %s221 = sphi 0, %s219
      %s222 = sphi 0, %s221
      %s236 = sphi 0, %s222
      %s240 = sphi 0, %s240
      %s242 = sphi 0, %s240
      %s243 = sphi 0, %s242
      %s257 = sphi 0, %s243
      %s261 = sphi 0, %s261
      %s263 = sphi 0, %s261
      %s264 = sphi 0, %s263
      %s278 = sphi 0, %s264
      %s284 = sphi 0, %s286
      %s287 = sphi 0, %s284
      %s288 = sphi 0, %s287
      %s304 = sphi 0, %s288
    $region4: #{tpu_custom_call.1} parent=1 // loop_header_branch
      %31 = sbr.rel (%p29) target = $region8
    $region5: #{tpu_custom_call.1} parent=1 // loop_body
      %s33 = ssub.s32 %s28, 1
      %s34 = ssub.s32 %s28, 2
      %s35 = sadd.s32 %s28, 1
      %s36 = ssub.s32 %s28, %s35
      %p37 = scmp.eq.s32.totalorder %s36, 0
      %s39 = sadd.s32 %s38, 1
      %s40 = scalar_select %p37, %s38, %s39
      %p43 = pneg %p37
      %p44 = scmp.eq.s32.totalorder %s28, 1
      %p45 = por %p43, %p44
      %p46 = scmp.ne.s32.totalorder %s38, %s41
      %p47 = scmp.eq.s32.totalorder %s28, 0
      %p48 = por %p46, %p47
      %p49 = scmp.ne.s32.totalorder %s38, %s41
      %p50 = scmp.eq.s32.totalorder %s33, 1
      %p51 = por %p49, %p50
      %p52 = scmp.ne.s32.totalorder %s41, %s42
      %p53 = scmp.eq.s32.totalorder %s33, 0
      %p54 = por %p52, %p53
      %p55 = scmp.ne.s32.totalorder %s41, %s42
      %p56 = scmp.eq.s32.totalorder %s34, 1
      %p57 = por %p55, %p56
      %p59 = scmp.ne.s32.totalorder %s42, %s58
      %p60 = scmp.eq.s32.totalorder %s34, 0
      %p61 = por %p59, %p60
      %s62 = ssub.s32 %s28, %s35
      %p63 = scmp.eq.s32.totalorder %s62, 0
      %s65 = sadd.s32 %s64, 1
      %s66 = scalar_select %p63, %s64, %s65
      %p69 = pneg %p63
      %p70 = scmp.eq.s32.totalorder %s28, 1
      %p71 = por %p69, %p70
      %p72 = scmp.ne.s32.totalorder %s64, %s67
      %p73 = scmp.eq.s32.totalorder %s28, 0
      %p74 = por %p72, %p73
      %p75 = scmp.ne.s32.totalorder %s64, %s67
      %p76 = scmp.eq.s32.totalorder %s33, 1
      %p77 = por %p75, %p76
      %p78 = scmp.ne.s32.totalorder %s67, %s68
      %p79 = scmp.eq.s32.totalorder %s33, 0
      %p80 = por %p78, %p79
      %p81 = scmp.ne.s32.totalorder %s67, %s68
      %p82 = scmp.eq.s32.totalorder %s34, 1
      %p83 = por %p81, %p82
      %p85 = scmp.ne.s32.totalorder %s68, %s84
      %p86 = scmp.eq.s32.totalorder %s34, 0
      %p87 = por %p85, %p86
      %s88 = ssub.s32 %s28, %s35
      %p89 = scmp.eq.s32.totalorder %s88, 0
      %s91 = sadd.s32 %s90, 1
      %s92 = scalar_select %p89, %s90, %s91
      %p95 = pneg %p89
      %p96 = scmp.eq.s32.totalorder %s28, 1
      %p97 = por %p95, %p96
      %p98 = scmp.ne.s32.totalorder %s90, %s93
      %p99 = scmp.eq.s32.totalorder %s28, 0
      %p100 = por %p98, %p99
      %p101 = scmp.ne.s32.totalorder %s90, %s93
      %p102 = scmp.eq.s32.totalorder %s33, 1
      %p103 = por %p101, %p102
      %p104 = scmp.ne.s32.totalorder %s93, %s94
      %p105 = scmp.eq.s32.totalorder %s33, 0
      %p106 = por %p104, %p105
      %p107 = scmp.ne.s32.totalorder %s93, %s94
      %p108 = scmp.eq.s32.totalorder %s34, 1
      %p109 = por %p107, %p108
      %p111 = scmp.ne.s32.totalorder %s94, %s110
      %p112 = scmp.eq.s32.totalorder %s34, 0
      %p113 = por %p111, %p112
      %s115 = sadd.s32 %s114, 1
      %p118 = scmp.eq.s32.totalorder %s28, 1
      %p119 = scmp.ne.s32.totalorder %s114, %s116
      %p120 = scmp.eq.s32.totalorder %s28, 0
      %p121 = por %p119, %p120
      %p122 = scmp.ne.s32.totalorder %s114, %s116
      %p123 = scmp.eq.s32.totalorder %s33, 1
      %p124 = por %p122, %p123
      %p125 = scmp.ne.s32.totalorder %s116, %s117
      %p126 = scmp.eq.s32.totalorder %s33, 0
      %p127 = por %p125, %p126
      %p128 = scmp.ne.s32.totalorder %s116, %s117
      %p129 = scmp.eq.s32.totalorder %s34, 1
      %p130 = por %p128, %p129
      %p132 = scmp.ne.s32.totalorder %s117, %s131
      %p133 = scmp.eq.s32.totalorder %s34, 0
      %p134 = por %p132, %p133
      %s136 = sadd.s32 %s135, 1
      %p139 = scmp.eq.s32.totalorder %s28, 1
      %p140 = scmp.ne.s32.totalorder %s135, %s137
      %p141 = scmp.eq.s32.totalorder %s28, 0
      %p142 = por %p140, %p141
      %p143 = scmp.ne.s32.totalorder %s135, %s137
      %p144 = scmp.eq.s32.totalorder %s33, 1
      %p145 = por %p143, %p144
      %p146 = scmp.ne.s32.totalorder %s137, %s138
      %p147 = scmp.eq.s32.totalorder %s33, 0
      %p148 = por %p146, %p147
      %p149 = scmp.ne.s32.totalorder %s137, %s138
      %p150 = scmp.eq.s32.totalorder %s34, 1
      %p151 = por %p149, %p150
      %p153 = scmp.ne.s32.totalorder %s138, %s152
      %p154 = scmp.eq.s32.totalorder %s34, 0
      %p155 = por %p153, %p154
      %s157 = sadd.s32 %s156, 1
      %p160 = scmp.eq.s32.totalorder %s28, 1
      %p161 = scmp.ne.s32.totalorder %s156, %s158
      %p162 = scmp.eq.s32.totalorder %s28, 0
      %p163 = por %p161, %p162
      %p164 = scmp.ne.s32.totalorder %s156, %s158
      %p165 = scmp.eq.s32.totalorder %s33, 1
      %p166 = por %p164, %p165
      %p167 = scmp.ne.s32.totalorder %s158, %s159
      %p168 = scmp.eq.s32.totalorder %s33, 0
      %p169 = por %p167, %p168
      %p170 = scmp.ne.s32.totalorder %s158, %s159
      %p171 = scmp.eq.s32.totalorder %s34, 1
      %p172 = por %p170, %p171
      %p174 = scmp.ne.s32.totalorder %s159, %s173
      %p175 = scmp.eq.s32.totalorder %s34, 0
      %p176 = por %p174, %p175
      %s178 = sadd.s32 %s177, 1
      %p181 = scmp.eq.s32.totalorder %s28, 1
      %p182 = scmp.ne.s32.totalorder %s177, %s179
      %p183 = scmp.eq.s32.totalorder %s28, 0
      %p184 = por %p182, %p183
      %p185 = scmp.ne.s32.totalorder %s177, %s179
      %p186 = scmp.eq.s32.totalorder %s33, 1
      %p187 = por %p185, %p186
      %p188 = scmp.ne.s32.totalorder %s179, %s180
      %p189 = scmp.eq.s32.totalorder %s33, 0
      %p190 = por %p188, %p189
      %p191 = scmp.ne.s32.totalorder %s179, %s180
      %p192 = scmp.eq.s32.totalorder %s34, 1
      %p193 = por %p191, %p192
      %p195 = scmp.ne.s32.totalorder %s180, %s194
      %p196 = scmp.eq.s32.totalorder %s34, 0
      %p197 = por %p195, %p196
      %s199 = sadd.s32 %s198, 1
      %p202 = scmp.eq.s32.totalorder %s28, 1
      %p203 = scmp.ne.s32.totalorder %s198, %s200
      %p204 = scmp.eq.s32.totalorder %s28, 0
      %p205 = por %p203, %p204
      %p206 = scmp.ne.s32.totalorder %s198, %s200
      %p207 = scmp.eq.s32.totalorder %s33, 1
      %p208 = por %p206, %p207
      %p209 = scmp.ne.s32.totalorder %s200, %s201
      %p210 = scmp.eq.s32.totalorder %s33, 0
      %p211 = por %p209, %p210
      %p212 = scmp.ne.s32.totalorder %s200, %s201
      %p213 = scmp.eq.s32.totalorder %s34, 1
      %p214 = por %p212, %p213
      %p216 = scmp.ne.s32.totalorder %s201, %s215
      %p217 = scmp.eq.s32.totalorder %s34, 0
      %p218 = por %p216, %p217
      %s220 = sadd.s32 %s219, 1
      %p223 = scmp.eq.s32.totalorder %s28, 1
      %p224 = scmp.ne.s32.totalorder %s219, %s221
      %p225 = scmp.eq.s32.totalorder %s28, 0
      %p226 = por %p224, %p225
      %p227 = scmp.ne.s32.totalorder %s219, %s221
      %p228 = scmp.eq.s32.totalorder %s33, 1
      %p229 = por %p227, %p228
      %p230 = scmp.ne.s32.totalorder %s221, %s222
      %p231 = scmp.eq.s32.totalorder %s33, 0
      %p232 = por %p230, %p231
      %p233 = scmp.ne.s32.totalorder %s221, %s222
      %p234 = scmp.eq.s32.totalorder %s34, 1
      %p235 = por %p233, %p234
      %p237 = scmp.ne.s32.totalorder %s222, %s236
      %p238 = scmp.eq.s32.totalorder %s34, 0
      %p239 = por %p237, %p238
      %s241 = sadd.s32 %s240, 1
      %p244 = scmp.eq.s32.totalorder %s28, 1
      %p245 = scmp.ne.s32.totalorder %s240, %s242
      %p246 = scmp.eq.s32.totalorder %s28, 0
      %p247 = por %p245, %p246
      %p248 = scmp.ne.s32.totalorder %s240, %s242
      %p249 = scmp.eq.s32.totalorder %s33, 1
      %p250 = por %p248, %p249
      %p251 = scmp.ne.s32.totalorder %s242, %s243
      %p252 = scmp.eq.s32.totalorder %s33, 0
      %p253 = por %p251, %p252
      %p254 = scmp.ne.s32.totalorder %s242, %s243
      %p255 = scmp.eq.s32.totalorder %s34, 1
      %p256 = por %p254, %p255
      %p258 = scmp.ne.s32.totalorder %s243, %s257
      %p259 = scmp.eq.s32.totalorder %s34, 0
      %p260 = por %p258, %p259
      %s262 = sadd.s32 %s261, 1
      %p265 = scmp.eq.s32.totalorder %s28, 1
      %p266 = scmp.ne.s32.totalorder %s261, %s263
      %p267 = scmp.eq.s32.totalorder %s28, 0
      %p268 = por %p266, %p267
      %p269 = scmp.ne.s32.totalorder %s261, %s263
      %p270 = scmp.eq.s32.totalorder %s33, 1
      %p271 = por %p269, %p270
      %p272 = scmp.ne.s32.totalorder %s263, %s264
      %p273 = scmp.eq.s32.totalorder %s33, 0
      %p274 = por %p272, %p273
      %p275 = scmp.ne.s32.totalorder %s263, %s264
      %p276 = scmp.eq.s32.totalorder %s34, 1
      %p277 = por %p275, %p276
      %p279 = scmp.ne.s32.totalorder %s264, %s278
      %p280 = scmp.eq.s32.totalorder %s34, 0
      %p281 = por %p279, %p280
      %s282 = ssub.s32 %s28, %s35
      %p283 = scmp.eq.s32.totalorder %s282, 0
      %s285 = sadd.s32 %s284, 1
      %s286 = scalar_select %p283, %s284, %s285
      %p289 = pneg %p283
      %p290 = scmp.eq.s32.totalorder %s28, 1
      %p291 = por %p289, %p290
      %p292 = scmp.ne.s32.totalorder %s284, %s287
      %p293 = scmp.eq.s32.totalorder %s28, 0
      %p294 = por %p292, %p293
      %p295 = scmp.ne.s32.totalorder %s284, %s287
      %p296 = scmp.eq.s32.totalorder %s33, 1
      %p297 = por %p295, %p296
      %p298 = scmp.ne.s32.totalorder %s287, %s288
      %p299 = scmp.eq.s32.totalorder %s33, 0
      %p300 = por %p298, %p299
      %p301 = scmp.ne.s32.totalorder %s287, %s288
      %p302 = scmp.eq.s32.totalorder %s34, 1
      %p303 = por %p301, %p302
      %p305 = scmp.ne.s32.totalorder %s288, %s304
      %p306 = scmp.eq.s32.totalorder %s34, 0
      %p307 = por %p305, %p306
      %p308 = scmp.le.s32.totalorder 1, %s28
      %p309 = scmp.lt.s32.totalorder %s28, 3
      %p310 = pnand %p308, %p309
      %p311 = pneg %p310
      // Predicated region
      $region9: #{tpu_custom_call.1} parent=5 // pred_check
        _
      $region10: #{tpu_custom_call.1} parent=5 // pred_check_branch
        %313 = sbr.rel (%p310) target = $region12
      $region11: #{tpu_custom_call.1} parent=5 // pred_region
        %s314 = ssub.s32 %s28, 1
        // Predicated region
        $region13: #{tpu_custom_call.1} parent=11 // pred_check
          %p315 = pneg %p127
        $region14: #{tpu_custom_call.1} parent=11 // pred_check_branch
          %317 = sbr.rel (%p315) target = $region16
        $region15: #{tpu_custom_call.1} parent=11 // pred_region
          %319 = vsyncadd [#allocation9], 0
          %s320 = sshll.u32 %s3, 4
          %s321 = int_to_ptr.hbm [resolvable:$true] %s320
          %s322 = sshll.u32 [#allocation8], 4
          %s323 = int_to_ptr.vmem [resolvable:$true] %s322
          %328 = dma.hbm_to_vmem [thread:$0]  %s321, 512, %s323, [#allocation9], 128, 128, 8
        $region16: #{tpu_custom_call.1} parent=11 // pred_fallthru
          _
        // Predicated region
        $region17: #{tpu_custom_call.1} parent=11 // pred_check
          %p329 = pneg %p148
        $region18: #{tpu_custom_call.1} parent=11 // pred_check_branch
          %331 = sbr.rel (%p329) target = $region20
        $region19: #{tpu_custom_call.1} parent=11 // pred_region
          _
        $region20: #{tpu_custom_call.1} parent=11 // pred_fallthru
          _
        // Predicated region
        $region21: #{tpu_custom_call.1} parent=11 // pred_check
          %p332 = pneg %p169
        $region22: #{tpu_custom_call.1} parent=11 // pred_check_branch
          %334 = sbr.rel (%p332) target = $region24
        $region23: #{tpu_custom_call.1} parent=11 // pred_region
          %336 = vsyncadd [#allocation9], 0
          %s337 = sshll.u32 %s5, 4
          %s338 = int_to_ptr.hbm [resolvable:$true] %s337
          %s339 = sshll.u32 [#allocation10], 4
          %s340 = int_to_ptr.vmem [resolvable:$true] %s339
          %345 = dma.hbm_to_vmem [thread:$0]  %s338, 512, %s340, [#allocation9], 128, 128, 8
        $region24: #{tpu_custom_call.1} parent=11 // pred_fallthru
          _
        // Predicated region
        $region25: #{tpu_custom_call.1} parent=11 // pred_check
          %p346 = pneg %p190
        $region26: #{tpu_custom_call.1} parent=11 // pred_check_branch
          %348 = sbr.rel (%p346) target = $region28
        $region27: #{tpu_custom_call.1} parent=11 // pred_region
          _
        $region28: #{tpu_custom_call.1} parent=11 // pred_fallthru
          _
        // Predicated region
        $region29: #{tpu_custom_call.1} parent=11 // pred_check
          %p349 = pneg %p211
        $region30: #{tpu_custom_call.1} parent=11 // pred_check_branch
          %351 = sbr.rel (%p349) target = $region32
        $region31: #{tpu_custom_call.1} parent=11 // pred_region
          %353 = vsyncadd [#allocation12], 0
          %s354 = sshll.u32 %s7, 4
          %s355 = int_to_ptr.hbm [resolvable:$true] %s354
          %s356 = sshll.u32 [#allocation11], 4
          %s357 = int_to_ptr.vmem [resolvable:$true] %s356
          %362 = dma.hbm_to_vmem [thread:$0]  %s355, 512, %s357, [#allocation12], 128, 128, 8
        $region32: #{tpu_custom_call.1} parent=11 // pred_fallthru
          _
        // Predicated region
        $region33: #{tpu_custom_call.1} parent=11 // pred_check
          %p363 = pneg %p232
        $region34: #{tpu_custom_call.1} parent=11 // pred_check_branch
          %365 = sbr.rel (%p363) target = $region36
        $region35: #{tpu_custom_call.1} parent=11 // pred_region
          _
        $region36: #{tpu_custom_call.1} parent=11 // pred_fallthru
          _
        // Predicated region
        $region37: #{tpu_custom_call.1} parent=11 // pred_check
          %p366 = pneg %p253
        $region38: #{tpu_custom_call.1} parent=11 // pred_check_branch
          %368 = sbr.rel (%p366) target = $region40
        $region39: #{tpu_custom_call.1} parent=11 // pred_region
          %370 = vsyncadd [#allocation12], 0
          %s371 = sshll.u32 %s9, 4
          %s372 = int_to_ptr.hbm [resolvable:$true] %s371
          %s373 = sshll.u32 [#allocation13], 4
          %s374 = int_to_ptr.vmem [resolvable:$true] %s373
          %379 = dma.hbm_to_vmem [thread:$0]  %s372, 512, %s374, [#allocation12], 128, 128, 8
        $region40: #{tpu_custom_call.1} parent=11 // pred_fallthru
          _
        // Predicated region
        $region41: #{tpu_custom_call.1} parent=11 // pred_check
          %p380 = pneg %p274
        $region42: #{tpu_custom_call.1} parent=11 // pred_check_branch
          %382 = sbr.rel (%p380) target = $region44
        $region43: #{tpu_custom_call.1} parent=11 // pred_region
          _
        $region44: #{tpu_custom_call.1} parent=11 // pred_fallthru
          _
      $region12: #{tpu_custom_call.1} parent=5 // pred_fallthru
        _
      %p383 = scmp.lt.s32.totalorder %s28, 2
      // Predicated region
      $region45: #{tpu_custom_call.1} parent=5 // pred_check
        %p384 = pneg %p383
      $region46: #{tpu_custom_call.1} parent=5 // pred_check_branch
        %386 = sbr.rel (%p384) target = $region48
      $region47: #{tpu_custom_call.1} parent=5 // pred_region
        // Predicated region
        $region49: #{tpu_custom_call.1} parent=47 // pred_check
          %p387 = pneg %p48
        $region50: #{tpu_custom_call.1} parent=47 // pred_check_branch
          %389 = sbr.rel (%p387) target = $region52
        $region51: #{tpu_custom_call.1} parent=47 // pred_region
          %s390 = sand.u32 %s38, 1
          %s391 = scalar_lea.sflag [#allocation3], %s390
          %s392 = sand.u32 %s38, 1
          %s393 = smul.addr %s392, 8
          %s394 = scalar_lea.vmem [#allocation2], %s393
          %396 = vsyncadd %s391, 0
          %s397 = smul.addr %s28, 8
          %s398 = scalar_lea.hbm %s0, %s397
          %s400 = sshll.u32 %s398, 4
          %s401 = int_to_ptr.hbm [resolvable:$true] %s400
          %s402 = sshll.u32 %s394, 4
          %s403 = int_to_ptr.vmem [resolvable:$true] %s402
          %405 = dma.hbm_to_vmem [thread:$0]  %s401, 128, %s403, %s391
        $region52: #{tpu_custom_call.1} parent=47 // pred_fallthru
          _
        // Predicated region
        $region53: #{tpu_custom_call.1} parent=47 // pred_check
          %p406 = pneg %p74
        $region54: #{tpu_custom_call.1} parent=47 // pred_check_branch
          %408 = sbr.rel (%p406) target = $region56
        $region55: #{tpu_custom_call.1} parent=47 // pred_region
          %s409 = sand.u32 %s28, 1
          %s410 = scalar_lea.sflag [#allocation6], %s409
          %s411 = sand.u32 %s64, 1
          %s412 = smul.addr %s411, 8
          %s413 = scalar_lea.vmem [#allocation5], %s412
          %415 = vsyncadd %s410, 0
          %s416 = smul.addr %s28, 8
          %s417 = scalar_lea.hbm %s1, %s416
          %s419 = sshll.u32 %s417, 4
          %s420 = int_to_ptr.hbm [resolvable:$true] %s419
          %s421 = sshll.u32 %s413, 4
          %s422 = int_to_ptr.vmem [resolvable:$true] %s421
          %424 = dma.hbm_to_vmem [thread:$0]  %s420, 128, %s422, %s410
        $region56: #{tpu_custom_call.1} parent=47 // pred_fallthru
          _
        // Predicated region
        $region57: #{tpu_custom_call.1} parent=47 // pred_check
          %p425 = pneg %p100
        $region58: #{tpu_custom_call.1} parent=47 // pred_check_branch
          %427 = sbr.rel (%p425) target = $region60
        $region59: #{tpu_custom_call.1} parent=47 // pred_region
          %s428 = sand.u32 %s28, 1
          %s429 = scalar_lea.sflag [#allocation6], %s428
          %s430 = sand.u32 %s90, 1
          %s431 = smul.addr %s430, 8
          %s432 = scalar_lea.vmem [#allocation7], %s431
          %434 = vsyncadd %s429, 0
          %s435 = smul.addr %s28, 8
          %s436 = scalar_lea.hbm %s2, %s435
          %s438 = sshll.u32 %s436, 4
          %s439 = int_to_ptr.hbm [resolvable:$true] %s438
          %s440 = sshll.u32 %s432, 4
          %s441 = int_to_ptr.vmem [resolvable:$true] %s440
          %443 = dma.hbm_to_vmem [thread:$0]  %s439, 128, %s441, %s429
        $region60: #{tpu_custom_call.1} parent=47 // pred_fallthru
          _
      $region48: #{tpu_custom_call.1} parent=5 // pred_fallthru
        _
      %p444 = scmp.le.s32.totalorder 1, %s28
      %p445 = scmp.lt.s32.totalorder %s28, 3
      %p446 = pnand %p444, %p445
      %p447 = pneg %p446
      // Predicated region
      $region61: #{tpu_custom_call.1} parent=5 // pred_check
        _
      $region62: #{tpu_custom_call.1} parent=5 // pred_check_branch
        %449 = sbr.rel (%p446) target = $region64
      $region63: #{tpu_custom_call.1} parent=5 // pred_region
        %s450 = ssub.s32 %s28, 1
        %s451 = sand.u32 %s41, 1
        %s452 = scalar_lea.sflag [#allocation3], %s451
        %s453 = sand.u32 %s41, 1
        %s454 = smul.addr %s453, 8
        %s455 = scalar_lea.vmem [#allocation2], %s454
        // Predicated region
        $region65: #{tpu_custom_call.1} parent=63 // pred_check
          %p456 = pneg %p54
        $region66: #{tpu_custom_call.1} parent=63 // pred_check_branch
          %458 = sbr.rel (%p456) target = $region68
        $region67: #{tpu_custom_call.1} parent=63 // pred_region
          %460 = dma.done %s452, 128
        $region68: #{tpu_custom_call.1} parent=63 // pred_fallthru
          _
        %s461 = sand.u32 %s33, 1
        %s462 = scalar_lea.sflag [#allocation6], %s461
        %s463 = sand.u32 %s67, 1
        %s464 = smul.addr %s463, 8
        %s465 = scalar_lea.vmem [#allocation5], %s464
        // Predicated region
        $region69: #{tpu_custom_call.1} parent=63 // pred_check
          %p466 = pneg %p80
        $region70: #{tpu_custom_call.1} parent=63 // pred_check_branch
          %468 = sbr.rel (%p466) target = $region72
        $region71: #{tpu_custom_call.1} parent=63 // pred_region
          %470 = dma.done %s462, 128
        $region72: #{tpu_custom_call.1} parent=63 // pred_fallthru
          _
        %s471 = sand.u32 %s33, 1
        %s472 = scalar_lea.sflag [#allocation6], %s471
        %s473 = sand.u32 %s93, 1
        %s474 = smul.addr %s473, 8
        %s475 = scalar_lea.vmem [#allocation7], %s474
        // Predicated region
        $region73: #{tpu_custom_call.1} parent=63 // pred_check
          %p476 = pneg %p106
        $region74: #{tpu_custom_call.1} parent=63 // pred_check_branch
          %478 = sbr.rel (%p476) target = $region76
        $region75: #{tpu_custom_call.1} parent=63 // pred_region
          %480 = dma.done %s472, 128
        $region76: #{tpu_custom_call.1} parent=63 // pred_fallthru
          _
        // Predicated region
        $region77: #{tpu_custom_call.1} parent=63 // pred_check
          %p481 = pneg %p127
        $region78: #{tpu_custom_call.1} parent=63 // pred_check_branch
          %483 = sbr.rel (%p481) target = $region80
        $region79: #{tpu_custom_call.1} parent=63 // pred_region
          %485 = dma.done [#allocation9], 512
        $region80: #{tpu_custom_call.1} parent=63 // pred_fallthru
          _
        // Predicated region
        $region81: #{tpu_custom_call.1} parent=63 // pred_check
          %p486 = pneg %p169
        $region82: #{tpu_custom_call.1} parent=63 // pred_check_branch
          %488 = sbr.rel (%p486) target = $region84
        $region83: #{tpu_custom_call.1} parent=63 // pred_region
          %490 = dma.done [#allocation9], 512
        $region84: #{tpu_custom_call.1} parent=63 // pred_fallthru
          _
        // Predicated region
        $region85: #{tpu_custom_call.1} parent=63 // pred_check
          %p491 = pneg %p211
        $region86: #{tpu_custom_call.1} parent=63 // pred_check_branch
          %493 = sbr.rel (%p491) target = $region88
        $region87: #{tpu_custom_call.1} parent=63 // pred_region
          %495 = dma.done [#allocation12], 512
        $region88: #{tpu_custom_call.1} parent=63 // pred_fallthru
          _
        // Predicated region
        $region89: #{tpu_custom_call.1} parent=63 // pred_check
          %p496 = pneg %p253
        $region90: #{tpu_custom_call.1} parent=63 // pred_check_branch
          %498 = sbr.rel (%p496) target = $region92
        $region91: #{tpu_custom_call.1} parent=63 // pred_region
          %500 = dma.done [#allocation12], 512
        $region92: #{tpu_custom_call.1} parent=63 // pred_fallthru
          _
        %s501 = sand.u32 %s41, 1
        %s502 = scalar_lea.sflag [#allocation3], %s501
        %s503 = sand.u32 %s41, 1
        %s504 = smul.addr %s503, 8
        %s505 = scalar_lea.vmem [#allocation2], %s504
        %p506 = pneg %p54
        %p507 = pneg %p51
        %s508 = sand.u32 %s33, 1
        %s509 = scalar_lea.sflag [#allocation6], %s508
        %s510 = sand.u32 %s67, 1
        %s511 = smul.addr %s510, 8
        %s512 = scalar_lea.vmem [#allocation5], %s511
        %p513 = pneg %p80
        %p514 = pneg %p77
        %s515 = sand.u32 %s33, 1
        %s516 = scalar_lea.sflag [#allocation6], %s515
        %s517 = sand.u32 %s93, 1
        %s518 = smul.addr %s517, 8
        %s519 = scalar_lea.vmem [#allocation7], %s518
        %p520 = pneg %p106
        %p521 = pneg %p103
        %p522 = pneg %p127
        %p523 = pneg %p124
        %p524 = pneg %p148
        %p525 = pneg %p145
        %p526 = pneg %p169
        %p527 = pneg %p166
        %p528 = pneg %p190
        %p529 = pneg %p187
        %p530 = pneg %p211
        %p531 = pneg %p208
        %p532 = pneg %p232
        %p533 = pneg %p229
        %p534 = pneg %p253
        %p535 = pneg %p250
        %p536 = pneg %p274
        %p537 = pneg %p271
        %p538 = pneg %p300
        %p539 = pneg %p297
        %s540 = sand.u32 %s287, 1
        %s541 = scalar_lea.sflag [#allocation4], %s540
        %s542 = sand.u32 %s287, 1
        %s543 = smul.addr %s542, 8
        %s544 = scalar_lea.vmem [#allocation14], %s543
        %v545 = vld [vmem:[%s455] sm:$0xff]
        %v546 = vld [vmem:[#allocation8] sm:$0xff]
        %v547 = vld [vmem:[#allocation8 + $0x8] sm:$0xff]
        %v548 = vld [vmem:[#allocation8 + $0x10] sm:$0xff]
        %v549 = vld [vmem:[#allocation8 + $0x18] sm:$0xff]
        %v550 = vld [vmem:[%s4] sm:$0x1]
        %v552 = vperm.slane %v550, 0
        %vm554 = vcmask 261120
        %v556 = vsel %vm554, %v545, 0
        %558 = vmatpush.msra.mxu0 0.0
        %559 = vmatpush.msra.mxu0 0.0
        %560 = vmatpush.msra.mxu0 0.0
        %561 = vmatpush.msra.mxu0 0.0
        %562 = vmatpush.msra.mxu0 0.0
        %563 = vmatpush.msra.mxu0 0.0
        %564 = vmatpush.msra.mxu0 0.0
        %565 = vmatpush.msra.mxu0 0.0
        %566 = vmatpush.msra.mxu0 0.0
        %567 = vmatpush.msra.mxu0 0.0
        %568 = vmatpush.msra.mxu0 0.0
        %569 = vmatpush.msra.mxu0 0.0
        %570 = vmatpush.msra.mxu0 %v549
        %571 = vmatpush.msra.mxu0 %v548
        %572 = vmatpush.msra.mxu0 %v547
        %573 = vmatpush.msra.mxu0 %v546
        %574 = vmatmul.f32.gmra.mxu0 %v556
        %v575 = vpop.f32.mrf.mxu0
        %v576 = vadd.f32 %v552, %v575
        %577 = vdwg.mxu0
        %v578 = vld [vmem:[%s465] sm:$0xff]
        %v579 = vld [vmem:[#allocation10] sm:$0xff]
        %v580 = vld [vmem:[#allocation10 + $0x8] sm:$0xff]
        %v581 = vld [vmem:[#allocation10 + $0x10] sm:$0xff]
        %v582 = vld [vmem:[#allocation10 + $0x18] sm:$0xff]
        %v583 = vld [vmem:[%s6] sm:$0x1]
        %v585 = vperm.slane %v583, 0
        %v588 = vsel %vm554, %v578, 0
        %590 = vmatpush.msra.mxu0 0.0
        %591 = vmatpush.msra.mxu0 0.0
        %592 = vmatpush.msra.mxu0 0.0
        %593 = vmatpush.msra.mxu0 0.0
        %594 = vmatpush.msra.mxu0 0.0
        %595 = vmatpush.msra.mxu0 0.0
        %596 = vmatpush.msra.mxu0 0.0
        %597 = vmatpush.msra.mxu0 0.0
        %598 = vmatpush.msra.mxu0 0.0
        %599 = vmatpush.msra.mxu0 0.0
        %600 = vmatpush.msra.mxu0 0.0
        %601 = vmatpush.msra.mxu0 0.0
        %602 = vmatpush.msra.mxu0 %v582
        %603 = vmatpush.msra.mxu0 %v581
        %604 = vmatpush.msra.mxu0 %v580
        %605 = vmatpush.msra.mxu0 %v579
        %606 = vmatmul.f32.gmra.mxu0 %v588
        %v607 = vpop.f32.mrf.mxu0
        %v608 = vadd.f32 %v585, %v607
        %609 = vdwg.mxu0
        %v610 = vld [vmem:[%s475] sm:$0xff]
        %v611 = vld [vmem:[#allocation11] sm:$0xff]
        %v612 = vld [vmem:[#allocation11 + $0x8] sm:$0xff]
        %v613 = vld [vmem:[#allocation11 + $0x10] sm:$0xff]
        %v614 = vld [vmem:[#allocation11 + $0x18] sm:$0xff]
        %v615 = vld [vmem:[%s8] sm:$0x1]
        %v617 = vperm.slane %v615, 0
        %v620 = vsel %vm554, %v610, 0
        %622 = vmatpush.msra.mxu0 0.0
        %623 = vmatpush.msra.mxu0 0.0
        %624 = vmatpush.msra.mxu0 0.0
        %625 = vmatpush.msra.mxu0 0.0
        %626 = vmatpush.msra.mxu0 0.0
        %627 = vmatpush.msra.mxu0 0.0
        %628 = vmatpush.msra.mxu0 0.0
        %629 = vmatpush.msra.mxu0 0.0
        %630 = vmatpush.msra.mxu0 0.0
        %631 = vmatpush.msra.mxu0 0.0
        %632 = vmatpush.msra.mxu0 0.0
        %633 = vmatpush.msra.mxu0 0.0
        %634 = vmatpush.msra.mxu0 %v614
        %635 = vmatpush.msra.mxu0 %v613
        %636 = vmatpush.msra.mxu0 %v612
        %637 = vmatpush.msra.mxu0 %v611
        %638 = vmatmul.f32.gmra.mxu0 %v620
        %v639 = vpop.f32.mrf.mxu0
        %v640 = vadd.f32 %v617, %v639
        %641 = vdwg.mxu0
        %643 = vrot.lane.b32.xlu0 %v576, 120
        %v644 = vpop.permute.xlu0 %643
        %645 = vrot.lane.b32.xlu0 %v576, 112
        %v646 = vpop.permute.xlu0 %645
        %647 = vrot.lane.b32.xlu0 %v576, 104
        %v648 = vpop.permute.xlu0 %647
        %650 = vrot.lane.b32.xlu0 %v608, 120
        %v651 = vpop.permute.xlu0 %650
        %652 = vrot.lane.b32.xlu0 %v608, 112
        %v653 = vpop.permute.xlu0 %652
        %654 = vrot.lane.b32.xlu0 %v608, 104
        %v655 = vpop.permute.xlu0 %654
        %657 = vrot.lane.b32.xlu0 %v640, 120
        %v658 = vpop.permute.xlu0 %657
        %660 = vrot.lane.b32.xlu0 %v640, 112
        %v661 = vpop.permute.xlu0 %660
        %663 = vrot.lane.b32.xlu0 %v640, 104
        %v664 = vpop.permute.xlu0 %663
        %vm666 = vcmask 64512
        %v667 = vsel %vm666, %v576, 0
        %v669 = vsel %vm666, %v608, 0
        %671 = vmatpush.xpose.msra.mxu0 0.0
        %672 = vmatpush.xpose.msra.mxu0 0.0
        %673 = vmatpush.xpose.msra.mxu0 0.0
        %674 = vmatpush.xpose.msra.mxu0 0.0
        %675 = vmatpush.xpose.msra.mxu0 0.0
        %676 = vmatpush.xpose.msra.mxu0 0.0
        %677 = vmatpush.xpose.msra.mxu0 0.0
        %678 = vmatpush.xpose.msra.mxu0 0.0
        %679 = vmatpush.xpose.msra.mxu0 0.0
        %680 = vmatpush.xpose.msra.mxu0 0.0
        %681 = vmatpush.xpose.msra.mxu0 0.0
        %682 = vmatpush.xpose.msra.mxu0 0.0
        %683 = vmatpush.xpose.msra.mxu0 0.0
        %684 = vmatpush.xpose.msra.mxu0 0.0
        %685 = vmatpush.xpose.msra.mxu0 0.0
        %686 = vmatpush.xpose.msra.mxu0 %v669
        %687 = vmatmul.f32.gmra.mxu0 %v667
        %v688 = vpop.f32.mrf.mxu0
        %v689 = vadd.f32 0.0, %v688
        %690 = vdwg.mxu0
        %v691 = vsel %vm666, %v644, 0
        %v693 = vsel %vm666, %v651, 0
        %695 = vmatpush.xpose.msra.mxu0 0.0
        %696 = vmatpush.xpose.msra.mxu0 0.0
        %697 = vmatpush.xpose.msra.mxu0 0.0
        %698 = vmatpush.xpose.msra.mxu0 0.0
        %699 = vmatpush.xpose.msra.mxu0 0.0
        %700 = vmatpush.xpose.msra.mxu0 0.0
        %701 = vmatpush.xpose.msra.mxu0 0.0
        %702 = vmatpush.xpose.msra.mxu0 0.0
        %703 = vmatpush.xpose.msra.mxu0 0.0
        %704 = vmatpush.xpose.msra.mxu0 0.0
        %705 = vmatpush.xpose.msra.mxu0 0.0
        %706 = vmatpush.xpose.msra.mxu0 0.0
        %707 = vmatpush.xpose.msra.mxu0 0.0
        %708 = vmatpush.xpose.msra.mxu0 0.0
        %709 = vmatpush.xpose.msra.mxu0 0.0
        %710 = vmatpush.xpose.msra.mxu0 %v693
        %711 = vmatmul.f32.gmra.mxu0 %v691
        %v712 = vpop.f32.mrf.mxu0
        %v713 = vadd.f32 0.0, %v712
        %714 = vdwg.mxu0
        %v715 = vsel %vm666, %v646, 0
        %v717 = vsel %vm666, %v653, 0
        %719 = vmatpush.xpose.msra.mxu0 0.0
        %720 = vmatpush.xpose.msra.mxu0 0.0
        %721 = vmatpush.xpose.msra.mxu0 0.0
        %722 = vmatpush.xpose.msra.mxu0 0.0
        %723 = vmatpush.xpose.msra.mxu0 0.0
        %724 = vmatpush.xpose.msra.mxu0 0.0
        %725 = vmatpush.xpose.msra.mxu0 0.0
        %726 = vmatpush.xpose.msra.mxu0 0.0
        %727 = vmatpush.xpose.msra.mxu0 0.0
        %728 = vmatpush.xpose.msra.mxu0 0.0
        %729 = vmatpush.xpose.msra.mxu0 0.0
        %730 = vmatpush.xpose.msra.mxu0 0.0
        %731 = vmatpush.xpose.msra.mxu0 0.0
        %732 = vmatpush.xpose.msra.mxu0 0.0
        %733 = vmatpush.xpose.msra.mxu0 0.0
        %734 = vmatpush.xpose.msra.mxu0 %v717
        %735 = vmatmul.f32.gmra.mxu0 %v715
        %v736 = vpop.f32.mrf.mxu0
        %v737 = vadd.f32 0.0, %v736
        %738 = vdwg.mxu0
        %v739 = vsel %vm666, %v648, 0
        %v741 = vsel %vm666, %v655, 0
        %743 = vmatpush.xpose.msra.mxu0 0.0
        %744 = vmatpush.xpose.msra.mxu0 0.0
        %745 = vmatpush.xpose.msra.mxu0 0.0
        %746 = vmatpush.xpose.msra.mxu0 0.0
        %747 = vmatpush.xpose.msra.mxu0 0.0
        %748 = vmatpush.xpose.msra.mxu0 0.0
        %749 = vmatpush.xpose.msra.mxu0 0.0
        %750 = vmatpush.xpose.msra.mxu0 0.0
        %751 = vmatpush.xpose.msra.mxu0 0.0
        %752 = vmatpush.xpose.msra.mxu0 0.0
        %753 = vmatpush.xpose.msra.mxu0 0.0
        %754 = vmatpush.xpose.msra.mxu0 0.0
        %755 = vmatpush.xpose.msra.mxu0 0.0
        %756 = vmatpush.xpose.msra.mxu0 0.0
        %757 = vmatpush.xpose.msra.mxu0 0.0
        %758 = vmatpush.xpose.msra.mxu0 %v741
        %759 = vmatmul.f32.gmra.mxu0 %v739
        %v760 = vpop.f32.mrf.mxu0
        %v761 = vadd.f32 0.0, %v760
        %762 = vdwg.mxu0
        %v763 = vsel %vm666, %v689, -inf
        %764 = vmax.xlane.f32.xlu0 %v763
        %v765 = vpop.xlane.xlu0 %764
        %v766 = vsel %vm666, %v713, -inf
        %767 = vmax.xlane.f32.xlu0 %v766
        %v768 = vpop.xlane.xlu0 %767
        %v769 = vsel %vm666, %v737, -inf
        %770 = vmax.xlane.f32.xlu0 %v769
        %v771 = vpop.xlane.xlu0 %770
        %v772 = vsel %vm666, %v761, -inf
        %773 = vmax.xlane.f32.xlu0 %v772
        %v774 = vpop.xlane.xlu0 %773
        %v775 = vsub.f32 %v689, %v765
        %v776 = vsub.f32 %v713, %v768
        %v777 = vsub.f32 %v737, %v771
        %v778 = vsub.f32 %v761, %v774
        %v779 = vmul.f32 %v775, 1.442695
        %v780 = vpow.pop %v779
        %v781 = vmul.f32 %v776, 1.442695
        %v782 = vpow.pop %v781
        %v783 = vmul.f32 %v777, 1.442695
        %v784 = vpow.pop %v783
        %v785 = vmul.f32 %v778, 1.442695
        %v786 = vpow.pop %v785
        %v787 = vsel %vm666, %v780, 0.0
        %788 = vadd.xlane.f32.xlu0 %v787
        %v789 = vpop.xlane.xlu0 %788
        %v790 = vsel %vm666, %v782, 0.0
        %791 = vadd.xlane.f32.xlu0 %v790
        %v792 = vpop.xlane.xlu0 %791
        %v793 = vsel %vm666, %v784, 0.0
        %794 = vadd.xlane.f32.xlu0 %v793
        %v795 = vpop.xlane.xlu0 %794
        %v796 = vsel %vm666, %v786, 0.0
        %797 = vadd.xlane.f32.xlu0 %v796
        %v798 = vpop.xlane.xlu0 %797
        %v799 = vrcp.pop %v789
        %v800 = vmul.f32 %v789, %v799
        %v801 = vsub.f32 1.0, %v800
        %v802 = vmul.f32 %v799, %v801
        %v803 = vadd.f32 %v799, %v802
        %vm804 = vweird.f32 %v789
        %vm805 = vweird.f32 %v799
        %vm806 = vmor %vm804, %vm805
        %v807 = vsel %vm806, %v799, %v803
        %v808 = vand.u32 2147483647, %v789
        %vm809 = vcmp.eq.f32.partialorder %v808, 8.507059e+37
        %v810 = vand.u32 %v789, 2147483648
        %v811 = vor.u32 1.1754944e-38, %v810
        %v812 = vsel %vm809, %v811, %v807
        %v813 = vrcp.pop %v792
        %v814 = vmul.f32 %v792, %v813
        %v815 = vsub.f32 1.0, %v814
        %v816 = vmul.f32 %v813, %v815
        %v817 = vadd.f32 %v813, %v816
        %vm818 = vweird.f32 %v792
        %vm819 = vweird.f32 %v813
        %vm820 = vmor %vm818, %vm819
        %v821 = vsel %vm820, %v813, %v817
        %v822 = vand.u32 2147483647, %v792
        %vm823 = vcmp.eq.f32.partialorder %v822, 8.507059e+37
        %v824 = vand.u32 %v792, 2147483648
        %v825 = vor.u32 1.1754944e-38, %v824
        %v826 = vsel %vm823, %v825, %v821
        %v827 = vrcp.pop %v795
        %v828 = vmul.f32 %v795, %v827
        %v829 = vsub.f32 1.0, %v828
        %v830 = vmul.f32 %v827, %v829
        %v831 = vadd.f32 %v827, %v830
        %vm832 = vweird.f32 %v795
        %vm833 = vweird.f32 %v827
        %vm834 = vmor %vm832, %vm833
        %v835 = vsel %vm834, %v827, %v831
        %v836 = vand.u32 2147483647, %v795
        %vm837 = vcmp.eq.f32.partialorder %v836, 8.507059e+37
        %v838 = vand.u32 %v795, 2147483648
        %v839 = vor.u32 1.1754944e-38, %v838
        %v840 = vsel %vm837, %v839, %v835
        %v841 = vrcp.pop %v798
        %v842 = vmul.f32 %v798, %v841
        %v843 = vsub.f32 1.0, %v842
        %v844 = vmul.f32 %v841, %v843
        %v845 = vadd.f32 %v841, %v844
        %vm846 = vweird.f32 %v798
        %vm847 = vweird.f32 %v841
        %vm848 = vmor %vm846, %vm847
        %v849 = vsel %vm848, %v841, %v845
        %v850 = vand.u32 2147483647, %v798
        %vm851 = vcmp.eq.f32.partialorder %v850, 8.507059e+37
        %v852 = vand.u32 %v798, 2147483648
        %v853 = vor.u32 1.1754944e-38, %v852
        %v854 = vsel %vm851, %v853, %v849
        %v856 = vsel %vm666, %v780, 0
        %858 = vmatpush.msra.mxu0 0.0
        %859 = vmatpush.msra.mxu0 0.0
        %860 = vmatpush.msra.mxu0 0.0
        %861 = vmatpush.msra.mxu0 0.0
        %862 = vmatpush.msra.mxu0 0.0
        %863 = vmatpush.msra.mxu0 0.0
        %864 = vmatpush.msra.mxu0 0.0
        %865 = vmatpush.msra.mxu0 0.0
        %866 = vmatpush.msra.mxu0 0.0
        %867 = vmatpush.msra.mxu0 0.0
        %868 = vmatpush.msra.mxu0 0.0
        %869 = vmatpush.msra.mxu0 0.0
        %870 = vmatpush.msra.mxu0 0.0
        %871 = vmatpush.msra.mxu0 0.0
        %872 = vmatpush.msra.mxu0 0.0
        %873 = vmatpush.msra.mxu0 %v640
        %874 = vmatmul.f32.gmra.mxu0 %v856
        %v875 = vpop.f32.mrf.mxu0
        %v876 = vadd.f32 0.0, %v875
        %877 = vdwg.mxu0
        %v879 = vsel %vm666, %v782, 0
        %881 = vmatpush.msra.mxu0 0.0
        %882 = vmatpush.msra.mxu0 0.0
        %883 = vmatpush.msra.mxu0 0.0
        %884 = vmatpush.msra.mxu0 0.0
        %885 = vmatpush.msra.mxu0 0.0
        %886 = vmatpush.msra.mxu0 0.0
        %887 = vmatpush.msra.mxu0 0.0
        %888 = vmatpush.msra.mxu0 0.0
        %889 = vmatpush.msra.mxu0 0.0
        %890 = vmatpush.msra.mxu0 0.0
        %891 = vmatpush.msra.mxu0 0.0
        %892 = vmatpush.msra.mxu0 0.0
        %893 = vmatpush.msra.mxu0 0.0
        %894 = vmatpush.msra.mxu0 0.0
        %895 = vmatpush.msra.mxu0 0.0
        %896 = vmatpush.msra.mxu0 %v658
        %897 = vmatmul.f32.gmra.mxu0 %v879
        %v898 = vpop.f32.mrf.mxu0
        %v899 = vadd.f32 0.0, %v898
        %900 = vdwg.mxu0
        %v902 = vsel %vm666, %v784, 0
        %904 = vmatpush.msra.mxu0 0.0
        %905 = vmatpush.msra.mxu0 0.0
        %906 = vmatpush.msra.mxu0 0.0
        %907 = vmatpush.msra.mxu0 0.0
        %908 = vmatpush.msra.mxu0 0.0
        %909 = vmatpush.msra.mxu0 0.0
        %910 = vmatpush.msra.mxu0 0.0
        %911 = vmatpush.msra.mxu0 0.0
        %912 = vmatpush.msra.mxu0 0.0
        %913 = vmatpush.msra.mxu0 0.0
        %914 = vmatpush.msra.mxu0 0.0
        %915 = vmatpush.msra.mxu0 0.0
        %916 = vmatpush.msra.mxu0 0.0
        %917 = vmatpush.msra.mxu0 0.0
        %918 = vmatpush.msra.mxu0 0.0
        %919 = vmatpush.msra.mxu0 %v661
        %920 = vmatmul.f32.gmra.mxu0 %v902
        %v921 = vpop.f32.mrf.mxu0
        %v922 = vadd.f32 0.0, %v921
        %923 = vdwg.mxu0
        %v925 = vsel %vm666, %v786, 0
        %927 = vmatpush.msra.mxu0 0.0
        %928 = vmatpush.msra.mxu0 0.0
        %929 = vmatpush.msra.mxu0 0.0
        %930 = vmatpush.msra.mxu0 0.0
        %931 = vmatpush.msra.mxu0 0.0
        %932 = vmatpush.msra.mxu0 0.0
        %933 = vmatpush.msra.mxu0 0.0
        %934 = vmatpush.msra.mxu0 0.0
        %935 = vmatpush.msra.mxu0 0.0
        %936 = vmatpush.msra.mxu0 0.0
        %937 = vmatpush.msra.mxu0 0.0
        %938 = vmatpush.msra.mxu0 0.0
        %939 = vmatpush.msra.mxu0 0.0
        %940 = vmatpush.msra.mxu0 0.0
        %941 = vmatpush.msra.mxu0 0.0
        %942 = vmatpush.msra.mxu0 %v664
        %943 = vmatmul.f32.gmra.mxu0 %v925
        %v944 = vpop.f32.mrf.mxu0
        %v945 = vadd.f32 0.0, %v944
        %946 = vdwg.mxu0
        %v947 = vmul.f32 %v876, %v812
        %v948 = vmul.f32 %v899, %v826
        %v949 = vmul.f32 %v922, %v840
        %v950 = vmul.f32 %v945, %v854
        %952 = vrot.lane.b32.xlu0 %v948, 8
        %v953 = vpop.permute.xlu0 %952
        %956 = vrot.lane.b32.xlu0 %v949, 16
        %v957 = vpop.permute.xlu0 %956
        %960 = vrot.lane.b32.xlu0 %v950, 24
        %v961 = vpop.permute.xlu0 %960
        %v963 = vsel %vm666, %v947, %v953
        %vm964 = vcmask 130048
        %v965 = vsel %vm964, %v963, %v957
        %vm966 = vcmask 195584
        %v967 = vsel %vm966, %v965, %v961
        %v968 = vld [vmem:[#allocation13] sm:$0xff]
        %v969 = vld [vmem:[#allocation13 + $0x8] sm:$0xff]
        %v970 = vld [vmem:[#allocation13 + $0x10] sm:$0xff]
        %v971 = vld [vmem:[#allocation13 + $0x18] sm:$0xff]
        %v972 = vld [vmem:[%s10] sm:$0x1]
        %v974 = vperm.slane %v972, 0
        %v977 = vsel %vm554, %v967, 0
        %979 = vmatpush.msra.mxu0 0.0
        %980 = vmatpush.msra.mxu0 0.0
        %981 = vmatpush.msra.mxu0 0.0
        %982 = vmatpush.msra.mxu0 0.0
        %983 = vmatpush.msra.mxu0 0.0
        %984 = vmatpush.msra.mxu0 0.0
        %985 = vmatpush.msra.mxu0 0.0
        %986 = vmatpush.msra.mxu0 0.0
        %987 = vmatpush.msra.mxu0 0.0
        %988 = vmatpush.msra.mxu0 0.0
        %989 = vmatpush.msra.mxu0 0.0
        %990 = vmatpush.msra.mxu0 0.0
        %991 = vmatpush.msra.mxu0 %v971
        %992 = vmatpush.msra.mxu0 %v970
        %993 = vmatpush.msra.mxu0 %v969
        %994 = vmatpush.msra.mxu0 %v968
        %995 = vmatmul.f32.gmra.mxu0 %v977
        %v996 = vpop.f32.mrf.mxu0
        %v997 = vadd.f32 %v974, %v996
        %998 = vdwg.mxu0
        %999 = vst.msk [vmem:[%s544] sm:$0xff] %vm554, %v997
        %s1000 = sand.u32 %s287, 1
        %s1001 = scalar_lea.sflag [#allocation4], %s1000
        %s1002 = sand.u32 %s287, 1
        %s1003 = smul.addr %s1002, 8
        %s1004 = scalar_lea.vmem [#allocation14], %s1003
        // Predicated region
        $region93: #{tpu_custom_call.1} parent=63 // pred_check
          %p1005 = pneg %p297
        $region94: #{tpu_custom_call.1} parent=63 // pred_check_branch
          %1007 = sbr.rel (%p1005) target = $region96
        $region95: #{tpu_custom_call.1} parent=63 // pred_region
          %1009 = vsyncadd %s1001, 0
          %s1010 = smul.addr %s33, 8
          %s1011 = scalar_lea.hbm %s11, %s1010
          %s1013 = sshll.u32 %s1004, 4
          %s1014 = int_to_ptr.vmem [resolvable:$true] %s1013
          %s1015 = sshll.u32 %s1011, 4
          %s1016 = int_to_ptr.hbm [resolvable:$true] %s1015
          %1018 = dma.vmem_to_hbm [thread:$0]  %s1014, 128, %s1016, %s1001
        $region96: #{tpu_custom_call.1} parent=63 // pred_fallthru
          _
      $region64: #{tpu_custom_call.1} parent=5 // pred_fallthru
        _
      %p1019 = scmp.le.s32.totalorder 2, %s28
      // Predicated region
      $region97: #{tpu_custom_call.1} parent=5 // pred_check
        %p1020 = pneg %p1019
      $region98: #{tpu_custom_call.1} parent=5 // pred_check_branch
        %1022 = sbr.rel (%p1020) target = $region100
      $region99: #{tpu_custom_call.1} parent=5 // pred_region
        %s1023 = ssub.s32 %s28, 2
        // Predicated region
        $region101: #{tpu_custom_call.1} parent=99 // pred_check
          %p1024 = pneg %p303
        $region102: #{tpu_custom_call.1} parent=99 // pred_check_branch
          %1026 = sbr.rel (%p1024) target = $region104
        $region103: #{tpu_custom_call.1} parent=99 // pred_region
          %s1027 = sand.u32 %s288, 1
          %s1028 = scalar_lea.sflag [#allocation4], %s1027
          %s1029 = sand.u32 %s288, 1
          %s1030 = smul.addr %s1029, 8
          %s1031 = scalar_lea.vmem [#allocation14], %s1030
          %1033 = dma.done %s1028, 128
        $region104: #{tpu_custom_call.1} parent=99 // pred_fallthru
          _
      $region100: #{tpu_custom_call.1} parent=5 // pred_fallthru
        _
    $region6: #{tpu_custom_call.1} parent=1 // loop_footer
      %s32 = sadd.s32 1, %s28
    $region7: #{tpu_custom_call.1} parent=1 // loop_footer_branch
      %27 = sbr.rel target = $region3
    $region8: #{tpu_custom_call.1} parent=1 // loop_exit
      _
    %1034 = vsyncpa [#allocation3], 1
    %s1035 = scalar_lea.sflag [#allocation3], 1
    %1036 = vsyncpa %s1035, 1
    %1037 = vsyncpa [#allocation6], 1
    %s1038 = scalar_lea.sflag [#allocation6], 1
    %1039 = vsyncpa %s1038, 1
    %1040 = vsyncpa [#allocation9], 1
    %1041 = vsyncpa [#allocation12], 1
    %1042 = vsyncpa [#allocation4], 1
    %s1043 = scalar_lea.sflag [#allocation4], 1
    %1044 = vsyncpa %s1043, 1

</llo_original>
